<compile_context>
chip_gen: v6e
topology: v6e:2x2x1
jax: 0.10.0
libtpu: 0.0.40
codegen_flags: <defaults>
</compile_context>

<pallas_src>
import math
import numpy as np

import jax
import jax.numpy as jnp
from jax.experimental import pallas as pl
from jax.experimental.pallas import tpu as pltpu


# ---------------------------------------------------------------------------
# Per-generation VMEM sizing (review: 64-100 MiB on v5e/v6e, <=32 MiB on v7x).
# ---------------------------------------------------------------------------
def _vmem_limit_bytes():
    cap = None
    try:
        cap = int(getattr(pltpu.get_tpu_info(), "vmem_capacity_bytes", 0)) or None
    except Exception:
        cap = None
    if cap is None:
        cap = 64 * 1024 * 1024            # conservative: v7x physical VMEM per TC
    # ~half of physical VMEM: 64 MiB on v5e/v6e (128 MiB), 32 MiB on v7x (64 MiB).
    return int(min(100 * 2 ** 20, max(32 * 2 ** 20, cap // 2)))


_VMEM_LIMIT = _vmem_limit_bytes()
_TILE_BUDGET = int(_VMEM_LIMIT * 0.7)     # headroom for compiler scratch / semaphores


# ---------------------------------------------------------------------------
# Bicubic interpolation matrix, matching torch.nn.functional.interpolate
# (mode='bicubic', align_corners=False, scale_factor given, A = -0.75).
# Deterministic parameter-like precompute (glue), not runtime compute.
# ---------------------------------------------------------------------------
_A = -0.75


def _cubic1(x):  # |x| <= 1
    return ((_A + 2.0) * x - (_A + 3.0)) * x * x + 1.0


def _cubic2(x):  # 1 < |x| < 2
    return ((_A * x - 5.0 * _A) * x + 8.0 * _A) * x - 4.0 * _A


def bicubic_matrix(in_size, out_size, scale_factor):
    # TODO(synk): torch's recompute_scale_factor path can shift the source
    # coordinate by one sample at non-power-of-two sizes; the float
    # scale_factor form (as passed by the module) is reproduced here.
    m = np.zeros((out_size, in_size), dtype=np.float64)
    for o in range(out_size):
        src = (o + 0.5) / scale_factor - 0.5
        x0 = int(math.floor(src))
        t = src - x0
        coeffs = (_cubic2(t + 1.0), _cubic1(t), _cubic1(1.0 - t), _cubic2(2.0 - t))
        for k in range(4):
            idx = min(max(x0 - 1 + k, 0), in_size - 1)
            m[o, idx] += coeffs[k]
    return m.astype(np.float32)


# ---------------------------------------------------------------------------
# Tiling helpers (no full-extent fallback: divisor search, else pad & slice).
# ---------------------------------------------------------------------------
def _choose_tile(extent, target, align=8):
    """Return (tile, padded_extent).  tile is a multiple of `align` dividing
    padded_extent; if extent itself is small enough it is used unpadded."""
    target = int(max(1, target))
    if extent <= target or extent <= align:
        return extent, extent
    t_max = max(align, (min(target, extent) // align) * align)
    t = t_max
    while t >= align:
        if extent % t == 0:
            return t, extent
        t -= align
    pad = pl.cdiv(extent, t_max) * t_max
    return t_max, pad


def _lateral_tile(M, Cin, Cout, x_itemsize, with_head, head_itemsize, lat_itemsize):
    # double-buffered in/out blocks + in-kernel f32 accumulator per row
    row = 2 * (Cin * x_itemsize + Cout * lat_itemsize
               + (Cout * head_itemsize if with_head else 0)) + Cout * 4
    fixed = 2 * Cin * Cout * 2 + 6 * Cout * 4 * 2   # weights + small bias/scale blocks
    target = (_TILE_BUDGET - fixed) // max(row, 1)
    target = max(256, min(2048, target))
    return _choose_tile(M, target, align=8)


# ---------------------------------------------------------------------------
# Pallas kernels
# ---------------------------------------------------------------------------
def _lateral_kernel(x_ref, w_ref, b_ref, lat_ref):
    # x: (TM, Cin), w: (Cin, Cout) bf16, b: (1, Cout) f32 -> lat: (TM, Cout) bf16
    x = x_ref[...].astype(jnp.bfloat16)
    acc = jnp.dot(x, w_ref[...], preferred_element_type=jnp.float32) + b_ref[...]
    lat_ref[...] = acc.astype(lat_ref.dtype)


def _lateral_head_kernel(x_ref, w_ref, b_ref, dww_ref, dwb_ref, lat_ref, head_ref):
    # Lateral 1x1 conv with the depthwise head (per-channel scale+bias) fused
    # into the epilogue.  Used for the top pyramid level only.
    x = x_ref[...].astype(jnp.bfloat16)
    acc = jnp.dot(x, w_ref[...], preferred_element_type=jnp.float32) + b_ref[...]
    lat_ref[...] = acc.astype(lat_ref.dtype)
    head_ref[...] = (acc * dww_ref[...] + dwb_ref[...]).astype(head_ref.dtype)


def _w_upsample_to_scratch(uw_ref, hi_ref, whi_ref):
    # Once per image (inner grid index 0): bicubic w-upsample of the coarse
    # level, kept resident in VMEM so every h-tile reuses it.  This amortizes
    # the small-K batched matmul over all h tiles instead of re-running it
    # (and re-materializing the Uw broadcast) every grid step.
    h_hi, w_hi, c = hi_ref.shape[1], hi_ref.shape[2], hi_ref.shape[3]
    w_lo = uw_ref.shape[0]
    uw_b = jnp.broadcast_to(uw_ref[...][None, :, :], (h_hi, w_lo, w_hi))
    whi = jnp.einsum('hoi,hic->hoc', uw_b, hi_ref[0],
                     preferred_element_type=jnp.float32)
    whi_ref[...] = whi.reshape(h_hi, w_lo * c).astype(whi_ref.dtype)


def _upsample_lat_head_kernel(uh_ref, uw_ref, hi_ref, lo_ref, dww_ref, dwb_ref,
                              lat_ref, head_ref, whi_ref):
    @pl.when(pl.program_id(1) == 0)
    def _():
        _w_upsample_to_scratch(uw_ref, hi_ref, whi_ref)
    # Per-step work: one wide, lane-dense MXU matmul + VPU epilogue.
    up = jnp.dot(uh_ref[...], whi_ref[...], preferred_element_type=jnp.float32)
    lat = lo_ref[0].astype(jnp.float32) + up
    lat_ref[0] = lat.astype(lat_ref.dtype)
    head_ref[0] = (lat * dww_ref[...] + dwb_ref[...]).astype(head_ref.dtype)


def _upsample_head_kernel(uh_ref, uw_ref, hi_ref, lo_ref, dww_ref, dwb_ref,
                          head_ref, whi_ref):
    # Head-only variant (bottom level): the lateral is never read again, so
    # its HBM write is skipped entirely.
    @pl.when(pl.program_id(1) == 0)
    def _():
        _w_upsample_to_scratch(uw_ref, hi_ref, whi_ref)
    up = jnp.dot(uh_ref[...], whi_ref[...], preferred_element_type=jnp.float32)
    lat = lo_ref[0].astype(jnp.float32) + up
    head_ref[0] = (lat * dww_ref[...] + dwb_ref[...]).astype(head_ref.dtype)


# ---------------------------------------------------------------------------
# Pallas wrappers
# ---------------------------------------------------------------------------
def lateral_conv(x, w, b, *, lateral_dtype=jnp.bfloat16):
    """1x1 Conv1d == pointwise linear over channels.  x: (N, L, Cin)."""
    N, L, Cin = x.shape
    Cout = w.shape[1]
    M = N * L
    TM, M_pad = _lateral_tile(M, Cin, Cout, x.dtype.itemsize, False, 0,
                              jnp.dtype(lateral_dtype).itemsize)
    x2 = x.reshape(M, Cin)
    if M_pad != M:
        x2 = jnp.pad(x2, ((0, M_pad - M), (0, 0)))
    lat = pl.pallas_call(
        _lateral_kernel,
        out_shape=jax.ShapeDtypeStruct((M_pad, Cout), lateral_dtype),
        grid=(M_pad // TM,),
        in_specs=[
            pl.BlockSpec((TM, Cin), lambda i: (i, 0)),
            pl.BlockSpec((Cin, Cout), lambda i: (0, 0)),
            pl.BlockSpec((1, Cout), lambda i: (0, 0)),
        ],
        out_specs=pl.BlockSpec((TM, Cout), lambda i: (i, 0)),
        compiler_params=pltpu.CompilerParams(
            dimension_semantics=("parallel",), vmem_limit_bytes=_VMEM_LIMIT),
    )(x2, w, b)
    if M_pad != M:
        lat = lat[:M]
    return lat.reshape(N, L, Cout)


def lateral_conv_head(x, w, b, dw_w, dw_b, *, lateral_dtype=jnp.bfloat16,
                      head_dtype=jnp.float32):
    """Lateral 1x1 conv + fused depthwise head (top pyramid level)."""
    N, L, Cin = x.shape
    Cout = w.shape[1]
    M = N * L
    TM, M_pad = _lateral_tile(M, Cin, Cout, x.dtype.itemsize, True,
                              jnp.dtype(head_dtype).itemsize,
                              jnp.dtype(lateral_dtype).itemsize)
    x2 = x.reshape(M, Cin)
    if M_pad != M:
        x2 = jnp.pad(x2, ((0, M_pad - M), (0, 0)))
    lat, head = pl.pallas_call(
        _lateral_head_kernel,
        out_shape=(jax.ShapeDtypeStruct((M_pad, Cout), lateral_dtype),
                   jax.ShapeDtypeStruct((M_pad, Cout), head_dtype)),
        grid=(M_pad // TM,),
        in_specs=[
            pl.BlockSpec((TM, Cin), lambda i: (i, 0)),
            pl.BlockSpec((Cin, Cout), lambda i: (0, 0)),
            pl.BlockSpec((1, Cout), lambda i: (0, 0)),
            pl.BlockSpec((1, Cout), lambda i: (0, 0)),
            pl.BlockSpec((1, Cout), lambda i: (0, 0)),
        ],
        out_specs=(pl.BlockSpec((TM, Cout), lambda i: (i, 0)),
                   pl.BlockSpec((TM, Cout), lambda i: (i, 0))),
        compiler_params=pltpu.CompilerParams(
            dimension_semantics=("parallel",), vmem_limit_bytes=_VMEM_LIMIT),
    )(x2, w, b, dw_w, dw_b)
    if M_pad != M:
        lat, head = lat[:M], head[:M]
    return lat.reshape(N, L, Cout), head.reshape(N, L, Cout)


def upsample_add_head(uh, uw, lat_hi, lat_lo, dw_w, dw_b, *, h_hi, w_hi,
                      h_lo, w_lo, emit_lateral, lateral_dtype=jnp.bfloat16,
                      head_dtype=jnp.float32):
    """lat_lo + separable_bicubic_upsample(lat_hi), with the depthwise head
    fused into the epilogue.  lat_hi: (N, h_hi, w_hi*C); lat_lo: (N, h_lo, w_lo*C)."""
    N = lat_hi.shape[0]
    C = dw_w.shape[-1]
    wc_lo = w_lo * C
    hi4 = lat_hi.reshape(N, h_hi, w_hi, C)             # free reshape
    lo3 = lat_lo.reshape(N, h_lo, wc_lo)               # free reshape
    # Per-channel scale/bias tiled over w so the epilogue stays lane-dense.
    dww = jnp.tile(dw_w.reshape(1, C), (1, w_lo))
    dwb = jnp.tile(dw_b.reshape(1, C), (1, w_lo))

    lat_b = jnp.dtype(lateral_dtype).itemsize
    head_b = jnp.dtype(head_dtype).itemsize
    # double-buffered blocks (lo in, lat/head out) + in-kernel f32 up & lat.
    row = wc_lo * (2 * (lat_b + head_b + (lat_b if emit_lateral else 0)) + 8)
    fixed = (2 * h_hi * w_hi * C * lat_b     # hi block (double-buffered)
             + h_hi * wc_lo * 2              # whi VMEM scratch (bf16)
             + 4 * wc_lo * 4                 # dww / dwb blocks
             + 4 * h_lo * h_hi * 2)          # uh/uw blocks (over-estimate)
    target = max(8, min(512, (_TILE_BUDGET - fixed) // max(row, 1)))
    TH, h_pad = _choose_tile(h_lo, target, align=8)
    if h_pad != h_lo:
        uh = jnp.pad(uh, ((0, h_pad - h_lo), (0, 0)))
        lo3 = jnp.pad(lo3, ((0, 0), (0, h_pad - h_lo), (0, 0)))
    n_h = h_pad // TH

    in_specs = [
        pl.BlockSpec((TH, h_hi), lambda n, i: (i, 0)),
        pl.BlockSpec((w_lo, w_hi), lambda n, i: (0, 0)),
        pl.BlockSpec((1, h_hi, w_hi, C), lambda n, i: (n, 0, 0, 0)),
        pl.BlockSpec((1, TH, wc_lo), lambda n, i: (n, i, 0)),
        pl.BlockSpec((1, wc_lo), lambda n, i: (0, 0)),
        pl.BlockSpec((1, wc_lo), lambda n, i: (0, 0)),
    ]
    out_block = pl.BlockSpec((1, TH, wc_lo), lambda n, i: (n, i, 0))
    scratch = [pltpu.VMEM((h_hi, wc_lo), jnp.bfloat16)]
    cp = pltpu.CompilerParams(
        # Inner axis is 'arbitrary': the w-upsampled scratch is initialised at
        # i == 0 and reused by later i (init-once carry); batch stays parallel
        # so megacore sharding splits over images.
        dimension_semantics=("parallel", "arbitrary"),
        vmem_limit_bytes=_VMEM_LIMIT)

    if emit_lateral:
        lat, head = pl.pallas_call(
            _upsample_lat_head_kernel,
            out_shape=(jax.ShapeDtypeStruct((N, h_pad, wc_lo), lateral_dtype),
                       jax.ShapeDtypeStruct((N, h_pad, wc_lo), head_dtype)),
            grid=(N, n_h),
            in_specs=in_specs,
            out_specs=(out_block, out_block),
            scratch_shapes=scratch,
            compiler_params=cp,
        )(uh, uw, hi4, lo3, dww, dwb)
        if h_pad != h_lo:
            lat, head = lat[:, :h_lo], head[:, :h_lo]
        return lat, head

    head = pl.pallas_call(
        _upsample_head_kernel,
        out_shape=jax.ShapeDtypeStruct((N, h_pad, wc_lo), head_dtype),
        grid=(N, n_h),
        in_specs=in_specs,
        out_specs=out_block,
        scratch_shapes=scratch,
        compiler_params=cp,
    )(uh, uw, hi4, lo3, dww, dwb)
    if h_pad != h_lo:
        head = head[:, :h_lo]
    return head


# ---------------------------------------------------------------------------
# FPN1D module (use_norm_pred=False path, as in the module's default)
# ---------------------------------------------------------------------------
class FPN1D:
    def __init__(self, in_channels, out_channel, patch_size=16,
                 use_norm_pred=False, head_dtype=jnp.float32,
                 lateral_dtype=jnp.bfloat16, key=None):
        assert not use_norm_pred, "use_norm_pred=True branch not implemented"
        # TODO(synk): use_norm_pred=True branch (LayerNorm + Linear pred head)
        # not implemented; the module's default (False) path is reproduced.
        assert out_channel == patch_size ** 2 * 3, (
            "forward's reshape requires out_channel == patch_size**2 * 3 "
            "when use_norm_pred=False")
        # TODO(synk): when out_channel is not a multiple of 128 (patch_size !=
        # 16) the lateral-conv output blocks use masked lane stores; padding
        # Cout in-kernel would need an extra slice copy, so it is not done.
        self.in_channels = list(in_channels)
        self.out_channel = out_channel
        self.patch_size = patch_size
        self.head_dtype = head_dtype        # bf16 halves the largest HBM write
        self.lateral_dtype = lateral_dtype  # f32 available for a bit-closer match
        self._bicubic_cache = {}

        if key is None:
            key = jax.random.PRNGKey(0)
        self.lateral_w, self.lateral_b = [], []
        self.fpn_w, self.fpn_b = [], []
        for cin in self.in_channels:
            key, k1, k2, k3, k4 = jax.random.split(key, 5)
            bound = 1.0 / math.sqrt(cin)
            # lateral conv weights stored bf16 (MXU operand), bias f32.
            self.lateral_w.append(
                jax.random.uniform(k1, (cin, out_channel), jnp.float32,
                                   -bound, bound).astype(jnp.bfloat16))
            self.lateral_b.append(
                jax.random.uniform(k2, (1, out_channel), jnp.float32, -bound, bound))
            # depthwise conv (groups==C, k=1): fan_in = 1 -> PyTorch bound = 1.
            self.fpn_w.append(
                jax.random.uniform(k3, (1, out_channel), jnp.float32, -1.0, 1.0))
            self.fpn_b.append(
                jax.random.uniform(k4, (1, out_channel), jnp.float32, -1.0, 1.0))

    def _get_bicubic(self, in_size, out_size, sf):
        k = (in_size, out_size, round(float(sf), 9))
        m = self._bicubic_cache.get(k)
        if m is None:
            m = jnp.asarray(bicubic_matrix(in_size, out_size, sf)).astype(jnp.bfloat16)
            self._bicubic_cache[k] = m
        return m

    def __call__(self, inputs, shapes):
        n_levels = len(self.in_channels)
        N = inputs[0].shape[0]
        C = self.out_channel
        laterals = [None] * n_levels     # stored as (N, h, w*C) bf16
        heads = [None] * n_levels

        # top level: lateral conv with the depthwise head fused in.
        top = n_levels - 1
        h_t, w_t = shapes[top]
        lat_t, head_t = lateral_conv_head(
            inputs[top], self.lateral_w[top], self.lateral_b[top],
            self.fpn_w[top], self.fpn_b[top],
            lateral_dtype=self.lateral_dtype, head_dtype=self.head_dtype)
        laterals[top] = lat_t.reshape(N, h_t, w_t * C)
        heads[top] = head_t

        # remaining levels: plain lateral conv (head fused into upsample_add).
        for i in range(n_levels - 1):
            h_i, w_i = shapes[i]
            lat = lateral_conv(inputs[i], self.lateral_w[i], self.lateral_b[i],
                               lateral_dtype=self.lateral_dtype)
            laterals[i] = lat.reshape(N, h_i, w_i * C)

        # top-down pathway: separable bicubic upsample + add + fused head.
        for i in range(n_levels - 1, 0, -1):
            h_hi, w_hi = shapes[i]
            h_lo, w_lo = shapes[i - 1]
            # F.interpolate gets ONE scale_factor (h ratio) and applies it to
            # both dims; reproduce that and require the sizes to line up.
            sf = h_lo / h_hi
            assert int(math.floor(h_hi * sf)) == h_lo and \
                   int(math.floor(w_hi * sf)) == w_lo, "incompatible FPN level shapes"
            uh = self._get_bicubic(h_hi, h_lo, sf)
            uw = self._get_bicubic(w_hi, w_lo, sf)
            emit_lat = (i - 1) > 0   # laterals[0] is never read again
            res = upsample_add_head(
                uh, uw, laterals[i], laterals[i - 1],
                self.fpn_w[i - 1], self.fpn_b[i - 1],
                h_hi=h_hi, w_hi=w_hi, h_lo=h_lo, w_lo=w_lo,
                emit_lateral=emit_lat,
                lateral_dtype=self.lateral_dtype, head_dtype=self.head_dtype)
            if emit_lat:
                laterals[i - 1], heads[i - 1] = res
            else:
                heads[i - 1] = res

        # un-patchify each head to (N, 3, h*p, w*p) — pure layout, plain JAX.
        feats = []
        p = self.patch_size
        for i in range(n_levels):
            h, w = shapes[i]
            x = heads[i]
            x = x.reshape(N, h, w, p, p, 3)
            x = jnp.transpose(x, (0, 5, 1, 3, 2, 4))      # 'nhwpqc -> nchpwq'
            x = x.reshape(N, 3, h * p, w * p)
            feats.append(x)
        return tuple(feats)


# ---------------------------------------------------------------------------
# Plain-JAX f32 reference (for a loose numerical sanity check).
# ---------------------------------------------------------------------------
def _reference(model, inputs, shapes):
    n = len(inputs)
    lats = []
    for i in range(n):
        w = model.lateral_w[i].astype(jnp.float32)
        lats.append(jnp.einsum('nlc,cd->nld', inputs[i], w) + model.lateral_b[i])
    for i in range(n - 1, 0, -1):
        h_hi, w_hi = shapes[i]
        h_lo, w_lo = shapes[i - 1]
        sf = h_lo / h_hi
        uh = jnp.asarray(bicubic_matrix(h_hi, h_lo, sf))
        uw = jnp.asarray(bicubic_matrix(w_hi, w_lo, sf))
        c = lats[i].shape[-1]
        x = lats[i].reshape(-1, h_hi, w_hi, c)
        x = jnp.einsum('oh,nhwc->nowc', uh, x)
        x = jnp.einsum('pw,nowc->nopc', uw, x)
        lats[i - 1] = lats[i - 1] + x.reshape(lats[i - 1].shape)
    feats = []
    p = model.patch_size
    for i in range(n):
        h, w = shapes[i]
        x = lats[i] * model.fpn_w[i] + model.fpn_b[i]
        N = x.shape[0]
        x = x.reshape(N, h, w, p, p, 3)
        x = jnp.transpose(x, (0, 5, 1, 3, 2, 4)).reshape(N, 3, h * p, w * p)
        feats.append(x)
    return feats


# ---------------------------------------------------------------------------
if __name__ == "__main__":
    key = jax.random.PRNGKey(0)
    N = 2
    patch_size = 4
    out_channel = patch_size ** 2 * 3          # 48
    in_channels = [8, 16]
    shapes = [(8, 8), (4, 4)]                  # L = [64, 16]

    keys = jax.random.split(key, len(in_channels) + 1)
    inputs = []
    for i, (cin, (h, w)) in enumerate(zip(in_channels, shapes)):
        inputs.append(jax.random.normal(keys[i], (N, h * w, cin), dtype=jnp.float32))

    model = FPN1D(in_channels, out_channel, patch_size=patch_size, key=keys[-1])
    feats = model(inputs, shapes)
    feats = jax.block_until_ready(feats)

    assert feats[0].shape == (N, 3, shapes[0][0] * patch_size, shapes[0][1] * patch_size)
    assert feats[1].shape == (N, 3, shapes[1][0] * patch_size, shapes[1][1] * patch_size)
    assert all(bool(jnp.all(jnp.isfinite(f))) for f in feats)

    # loose tolerance: laterals / bicubic operands are bf16 by design.
    ref = _reference(model, inputs, shapes)
    for f, r in zip(feats, ref):
        err = float(jnp.max(jnp.abs(f.astype(jnp.float32) - r)))
        assert err < 0.2, f"numerical mismatch vs f32 reference: {err}"

    print("KERNEL_OK")
</pallas_src>

<mosaic_0001>
module attributes {stable_mosaic.version = 11 : i64} {
  func.func @_lateral_head_kernel(%arg0: i32, %arg1: memref<32x16xf32, #tpu.memory_space<vmem>>, %arg2: memref<16x48xbf16, #tpu.memory_space<vmem>>, %arg3: memref<1x48xf32, #tpu.memory_space<vmem>>, %arg4: memref<1x48xf32, #tpu.memory_space<vmem>>, %arg5: memref<1x48xf32, #tpu.memory_space<vmem>>, %arg6: memref<32x48xbf16, #tpu.memory_space<vmem>>, %arg7: memref<32x48xf32, #tpu.memory_space<vmem>>) attributes {dimension_semantics = [#tpu.dimension_semantics<parallel>], iteration_bounds = array<i64: 1>, scalar_prefetch = 0 : i64, scratch_operands = 0 : i64, tpu.core_type = #tpu.core_type<tc>, window_params = [{transform_indices = @transform_0, window_bounds = array<i64: 32, 16>}, {pipeline_mode = #tpu.pipeline_mode<synchronous>, transform_indices = @transform_1, window_bounds = array<i64: 16, 48>}, {pipeline_mode = #tpu.pipeline_mode<synchronous>, transform_indices = @transform_2, window_bounds = array<i64: 1, 48>}, {pipeline_mode = #tpu.pipeline_mode<synchronous>, transform_indices = @transform_3, window_bounds = array<i64: 1, 48>}, {pipeline_mode = #tpu.pipeline_mode<synchronous>, transform_indices = @transform_4, window_bounds = array<i64: 1, 48>}, {transform_indices = @transform_5, window_bounds = array<i64: 32, 48>}, {transform_indices = @transform_6, window_bounds = array<i64: 32, 48>}]} {
    %c0 = arith.constant 0 : index
    %c0_0 = arith.constant 0 : index
    %0 = vector.load %arg1[%c0, %c0_0] : memref<32x16xf32, #tpu.memory_space<vmem>>, vector<32x16xf32>
    %1 = arith.truncf %0 : vector<32x16xf32> to vector<32x16xbf16>
    %c0_1 = arith.constant 0 : index
    %c0_2 = arith.constant 0 : index
    %2 = vector.load %arg2[%c0_1, %c0_2] : memref<16x48xbf16, #tpu.memory_space<vmem>>, vector<16x48xbf16>
    %cst = arith.constant dense<0.000000e+00> : vector<32x48xf32>
    %3 = tpu.matmul %1, %2, %cst {dimension_numbers = #tpu.dot_dimension_numbers<[1], [0], [0], [1], [0, 0, 1, 1], [], []>} : vector<32x16xbf16>, vector<16x48xbf16>, vector<32x48xf32> -> vector<32x48xf32>
    %c0_3 = arith.constant 0 : index
    %c0_4 = arith.constant 0 : index
    %4 = vector.load %arg3[%c0_3, %c0_4] : memref<1x48xf32, #tpu.memory_space<vmem>>, vector<1x48xf32>
    %5 = vector.broadcast %4 : vector<1x48xf32> to vector<32x48xf32>
    %6 = arith.addf %3, %5 : vector<32x48xf32>
    %7 = arith.truncf %6 : vector<32x48xf32> to vector<32x48xbf16>
    %c0_5 = arith.constant 0 : index
    %c0_6 = arith.constant 0 : index
    %8 = vector.load %arg6[%c0_5, %c0_6] : memref<32x48xbf16, #tpu.memory_space<vmem>>, vector<32x48xbf16>
    tpu.vector_store %arg6[%c0_5, %c0_6], %7 {strides = array<i32>} : memref<32x48xbf16, #tpu.memory_space<vmem>>, vector<32x48xbf16>,
    %c0_7 = arith.constant 0 : index
    %c0_8 = arith.constant 0 : index
    %9 = vector.load %arg4[%c0_7, %c0_8] : memref<1x48xf32, #tpu.memory_space<vmem>>, vector<1x48xf32>
    %10 = vector.broadcast %9 : vector<1x48xf32> to vector<32x48xf32>
    %11 = arith.mulf %6, %10 : vector<32x48xf32>
    %c0_9 = arith.constant 0 : index
    %c0_10 = arith.constant 0 : index
    %12 = vector.load %arg5[%c0_9, %c0_10] : memref<1x48xf32, #tpu.memory_space<vmem>>, vector<1x48xf32>
    %13 = vector.broadcast %12 : vector<1x48xf32> to vector<32x48xf32>
    %14 = arith.addf %11, %13 : vector<32x48xf32>
    %c0_11 = arith.constant 0 : index
    %c0_12 = arith.constant 0 : index
    %15 = vector.load %arg7[%c0_11, %c0_12] : memref<32x48xf32, #tpu.memory_space<vmem>>, vector<32x48xf32>
    tpu.vector_store %arg7[%c0_11, %c0_12], %14 {strides = array<i32>} : memref<32x48xf32, #tpu.memory_space<vmem>>, vector<32x48xf32>,
    return
  }
  func.func @transform_0(%arg0: i32) -> (i32, i32) {
    %c0_i32 = arith.constant 0 : i32
    %c0_i32_0 = arith.constant 0 : i32
    return %arg0, %c0_i32 : i32, i32
  }
  func.func @transform_1(%arg0: i32) -> (i32, i32) {
    %c0_i32 = arith.constant 0 : i32
    %c0_i32_0 = arith.constant 0 : i32
    %c0_i32_1 = arith.constant 0 : i32
    return %c0_i32, %c0_i32_0 : i32, i32
  }
  func.func @transform_2(%arg0: i32) -> (i32, i32) {
    %c0_i32 = arith.constant 0 : i32
    %c0_i32_0 = arith.constant 0 : i32
    %c0_i32_1 = arith.constant 0 : i32
    return %c0_i32, %c0_i32_0 : i32, i32
  }
  func.func @transform_3(%arg0: i32) -> (i32, i32) {
    %c0_i32 = arith.constant 0 : i32
    %c0_i32_0 = arith.constant 0 : i32
    %c0_i32_1 = arith.constant 0 : i32
    return %c0_i32, %c0_i32_0 : i32, i32
  }
  func.func @transform_4(%arg0: i32) -> (i32, i32) {
    %c0_i32 = arith.constant 0 : i32
    %c0_i32_0 = arith.constant 0 : i32
    %c0_i32_1 = arith.constant 0 : i32
    return %c0_i32, %c0_i32_0 : i32, i32
  }
  func.func @transform_5(%arg0: i32) -> (i32, i32) {
    %c0_i32 = arith.constant 0 : i32
    %c0_i32_0 = arith.constant 0 : i32
    return %arg0, %c0_i32 : i32, i32
  }
  func.func @transform_6(%arg0: i32) -> (i32, i32) {
    %c0_i32 = arith.constant 0 : i32
    %c0_i32_0 = arith.constant 0 : i32
    return %arg0, %c0_i32 : i32, i32
  }
}

</mosaic_0001>

<llo_original>
// kernel: tpu_custom_call.1
$region0: #{tpu_custom_call.1}
  #allocation0 [shape = 'u32[]', space=smem, size = 0x4, offset = 0x4, fixed_abs, tag = 'smem constant byte address 0x4 - core index']
  #allocation1 [shape = 'u32[144,128]{1,0:T(1,128)}', space=vmem, size = 0x12000, scoped, tag = 'internal scratch']
  %s0 = inlined_call_operand.vmem [shape: f32[32,16], index: 0, kind: input, shape index: {}]
  %s1 = inlined_call_operand.vmem [shape: bf16[16,48], index: 1, kind: input, shape index: {}]
  %s2 = inlined_call_operand.vmem [shape: f32[1,48], index: 2, kind: input, shape index: {}]
  %s3 = inlined_call_operand.vmem [shape: f32[1,48], index: 3, kind: input, shape index: {}]
  %s4 = inlined_call_operand.vmem [shape: f32[1,48], index: 4, kind: input, shape index: {}]
  %s5 = inlined_call_operand.hbm [shape: bf16[32,48], index: 5, kind: output, shape index: {0}]
  %s6 = inlined_call_operand.hbm [shape: f32[32,48], index: 6, kind: output, shape index: {1}]
  %7 = xla_tuple %s5, %s6
  %s8 = sld [smem:[#allocation0]]
  $region38: #{tpu_custom_call.1} parent=0
    _
  %s10 = ssub.s32 1, %s8
  %s11 = scalar_select 0, %s10, %s8
  $region1: #{tpu_custom_call.1} parent=0
    #allocation2 [shape = 'u8[8192]{0}', space=vmem, size = 0x2000, scoped, tag = 'output window, operand 0, single buffered']
    #allocation3 [shape = 's32[1]{0}', space=sflag, size = 0x4, scoped, tag = 'scoped memory for tpu_custom_call.1']
    #allocation4 [shape = 'u8[16384]{0}', space=vmem, size = 0x4000, scoped, tag = 'output window, operand 1, single buffered']
    #allocation5 [shape = 's32[1]{0}', space=sflag, size = 0x4, scoped, tag = 'scoped memory for tpu_custom_call.1']
    %12 = vsyncpa [#allocation3], 0
    %13 = vsyncpa [#allocation5], 0
    // Predicated region
    $region2: #{tpu_custom_call.1} parent=1 // pred_check
      _
    $region3: #{tpu_custom_call.1} parent=1 // pred_check_branch
      %15 = sbr.rel (0) target = $region5
    $region4: #{tpu_custom_call.1} parent=1 // pred_region
      _
    $region5: #{tpu_custom_call.1} parent=1 // pred_fallthru
      _
    // Predicated region
    $region6: #{tpu_custom_call.1} parent=1 // pred_check
      _
    $region7: #{tpu_custom_call.1} parent=1 // pred_check_branch
      %17 = sbr.rel (0) target = $region9
    $region8: #{tpu_custom_call.1} parent=1 // pred_region
      _
    $region9: #{tpu_custom_call.1} parent=1 // pred_fallthru
      _
    // Predicated region
    $region10: #{tpu_custom_call.1} parent=1 // pred_check
      _
    $region11: #{tpu_custom_call.1} parent=1 // pred_check_branch
      %19 = sbr.rel (0) target = $region13
    $region12: #{tpu_custom_call.1} parent=1 // pred_region
      _
    $region13: #{tpu_custom_call.1} parent=1 // pred_fallthru
      _
    // Predicated region
    $region14: #{tpu_custom_call.1} parent=1 // pred_check
      _
    $region15: #{tpu_custom_call.1} parent=1 // pred_check_branch
      %21 = sbr.rel (0) target = $region17
    $region16: #{tpu_custom_call.1} parent=1 // pred_region
      _
    $region17: #{tpu_custom_call.1} parent=1 // pred_fallthru
      _
    // Predicated region
    $region18: #{tpu_custom_call.1} parent=1 // pred_check
      _
    $region19: #{tpu_custom_call.1} parent=1 // pred_check_branch
      %23 = sbr.rel (0) target = $region21
    $region20: #{tpu_custom_call.1} parent=1 // pred_region
      _
    $region21: #{tpu_custom_call.1} parent=1 // pred_fallthru
      _
    %v25 = vld [vmem:[%s0] sm:$0xff]
    %v26 = vld [vmem:[%s0 + $0x8] sm:$0xff]
    %v27 = vld [vmem:[%s0 + $0x10] sm:$0xff]
    %v28 = vld [vmem:[%s0 + $0x18] sm:$0xff]
    %v29 = vpack.c.bf16 %v26, %v25
    %v30 = vpack.c.bf16 %v28, %v27
    %v31 = vld [vmem:[%s1] sm:$0xf]
    %v32 = vld [vmem:[%s1 + $0x4] sm:$0xf]
    %v33 = vld [vmem:[%s2] sm:$0x1]
    %v35 = vlaneseq
    %v36 = vshrl.u32 %v35, 7
    %v37 = vsub.s32 0, %v36
    %v38 = vrot.slane %v33, %v37
    %v42 = vunpack.c.l.b16 %v31
    %v43 = vunpack.c.l.b16 %v32
    %v44 = vpack.c.b16 %v43, %v42
    %vm46 = vcmask 130048
    %v48 = vsel %vm46, %v29, 0
    %v51 = vsel %vm46, %v30, 0
    %53 = vmatprep.subr.bf16.mxu0 0
    %54 = vmatpush1.bf16.msra.mxu0 0
    %55 = vmatprep.subr.bf16.mxu0 0
    %56 = vmatpush1.bf16.msra.mxu0 0
    %57 = vmatprep.subr.bf16.mxu0 0
    %58 = vmatpush1.bf16.msra.mxu0 0
    %59 = vmatprep.subr.bf16.mxu0 0
    %60 = vmatpush1.bf16.msra.mxu0 0
    %61 = vmatprep.subr.bf16.mxu0 0
    %62 = vmatpush1.bf16.msra.mxu0 0
    %63 = vmatprep.subr.bf16.mxu0 0
    %64 = vmatpush1.bf16.msra.mxu0 0
    %65 = vmatprep.subr.bf16.mxu0 0
    %66 = vmatpush1.bf16.msra.mxu0 0
    %67 = vmatprep.subr.bf16.mxu0 0
    %68 = vmatpush1.bf16.msra.mxu0 %v44
    %69 = vmatprep.subr.bf16.mxu0 0
    %70 = vmatpush2.bf16.msra.mxu0 0
    %71 = vmatprep.subr.bf16.mxu0 0
    %72 = vmatpush2.bf16.msra.mxu0 0
    %73 = vmatprep.subr.bf16.mxu0 0
    %74 = vmatpush2.bf16.msra.mxu0 0
    %75 = vmatprep.subr.bf16.mxu0 0
    %76 = vmatpush2.bf16.msra.mxu0 0
    %77 = vmatprep.subr.bf16.mxu0 0
    %78 = vmatpush2.bf16.msra.mxu0 0
    %79 = vmatprep.subr.bf16.mxu0 0
    %80 = vmatpush2.bf16.msra.mxu0 0
    %81 = vmatprep.subr.bf16.mxu0 0
    %82 = vmatpush2.bf16.msra.mxu0 0
    %83 = vmatprep.subr.bf16.mxu0 0
    %84 = vmatpush2.bf16.msra.mxu0 0
    %85 = vmatprep.mubr.bf16.mxu0 0
    %86 = vmatmul.mubr.bf16.gmra.mxu0 %v48
    %v87 = vpop.f32.mrf.mxu0
    %v88 = vadd.f32 %v38, %v87
    %v89 = vpop.f32.mrf.mxu0
    %v90 = vpop.f32.mrf.mxu0
    %v91 = vadd.f32 %v38, %v90
    %v92 = vpop.f32.mrf.mxu0
    %93 = vmatprep.mubr.bf16.mxu0 0
    %94 = vmatmul.mubr.bf16.gmra.mxu0 %v51
    %v95 = vpop.f32.mrf.mxu0
    %v96 = vadd.f32 %v38, %v95
    %v97 = vpop.f32.mrf.mxu0
    %v98 = vpop.f32.mrf.mxu0
    %v99 = vadd.f32 %v38, %v98
    %v100 = vpop.f32.mrf.mxu0
    %101 = vdwg.mxu0
    %v102 = vpack.c.bf16 %v91, %v88
    %v103 = vpack.c.bf16 %v99, %v96
    %v106 = vunpack.c.l.b16 %v102
    %v107 = vunpack.c.h.b16 %v102
    %v108 = vunpack.c.l.b16 %v103
    %v109 = vunpack.c.h.b16 %v103
    %v110 = vpack.c.b16 %v106, %v106
    %v111 = vpack.c.b16 %v107, %v107
    %v112 = vpack.c.b16 %v108, %v108
    %v113 = vpack.c.b16 %v109, %v109
    %vm118 = vcmask 388096
    %119 = vst.msk [vmem:[#allocation2] sm:$0xf] %vm118, %v110
    %120 = vst.msk [vmem:[#allocation2 + $0x4] sm:$0xf] %vm118, %v111
    %121 = vst.msk [vmem:[#allocation2 + $0x8] sm:$0xf] %vm118, %v112
    %122 = vst.msk [vmem:[#allocation2 + $0xc] sm:$0xf] %vm118, %v113
    %v123 = vld [vmem:[%s3] sm:$0x1]
    %v125 = vlaneseq
    %v126 = vshrl.u32 %v125, 7
    %v127 = vsub.s32 0, %v126
    %v128 = vrot.slane %v123, %v127
    %v130 = vmul.f32 %v88, %v128
    %v131 = vmul.f32 %v91, %v128
    %v132 = vmul.f32 %v96, %v128
    %v133 = vmul.f32 %v99, %v128
    %v134 = vld [vmem:[%s4] sm:$0x1]
    %v136 = vlaneseq
    %v137 = vshrl.u32 %v136, 7
    %v138 = vsub.s32 0, %v137
    %v139 = vrot.slane %v134, %v138
    %v141 = vadd.f32 %v130, %v139
    %v142 = vadd.f32 %v131, %v139
    %v143 = vadd.f32 %v132, %v139
    %v144 = vadd.f32 %v133, %v139
    %vm145 = vcmask 392192
    %146 = vst.msk [vmem:[#allocation4] sm:$0xff] %vm145, %v141
    %147 = vst.msk [vmem:[#allocation4 + $0x8] sm:$0xff] %vm145, %v142
    %148 = vst.msk [vmem:[#allocation4 + $0x10] sm:$0xff] %vm145, %v143
    %149 = vst.msk [vmem:[#allocation4 + $0x18] sm:$0xff] %vm145, %v144
    // Predicated region
    $region22: #{tpu_custom_call.1} parent=1 // pred_check
      _
    $region23: #{tpu_custom_call.1} parent=1 // pred_check_branch
      %151 = sbr.rel (0) target = $region25
    $region24: #{tpu_custom_call.1} parent=1 // pred_region
      %s153 = ssub.s32 256, 256
      %154 = vsyncadd [#allocation3], %s153
      %s155 = sshll.u32 [#allocation2], 4
      %s156 = int_to_ptr.vmem [resolvable:$true] %s155
      %161 = dma.vmem_to_hbm [thread:$0]  %s156, 256, %s5, [#allocation3], 64, 64, 4
    $region25: #{tpu_custom_call.1} parent=1 // pred_fallthru
      _
    // Predicated region
    $region26: #{tpu_custom_call.1} parent=1 // pred_check
      _
    $region27: #{tpu_custom_call.1} parent=1 // pred_check_branch
      %163 = sbr.rel (0) target = $region29
    $region28: #{tpu_custom_call.1} parent=1 // pred_region
      %s165 = ssub.s32 512, 512
      %166 = vsyncadd [#allocation5], %s165
      %s167 = sshll.u32 [#allocation4], 4
      %s168 = int_to_ptr.vmem [resolvable:$true] %s167
      %173 = dma.vmem_to_hbm [thread:$0]  %s168, 512, %s6, [#allocation5], 128, 128, 8
    $region29: #{tpu_custom_call.1} parent=1 // pred_fallthru
      _
    // Predicated region
    $region30: #{tpu_custom_call.1} parent=1 // pred_check
      _
    $region31: #{tpu_custom_call.1} parent=1 // pred_check_branch
      %175 = sbr.rel (0) target = $region33
    $region32: #{tpu_custom_call.1} parent=1 // pred_region
      %176 = dma.done [#allocation3], 256
    $region33: #{tpu_custom_call.1} parent=1 // pred_fallthru
      _
    // Predicated region
    $region34: #{tpu_custom_call.1} parent=1 // pred_check
      _
    $region35: #{tpu_custom_call.1} parent=1 // pred_check_branch
      %178 = sbr.rel (0) target = $region37
    $region36: #{tpu_custom_call.1} parent=1 // pred_region
      %179 = dma.done [#allocation5], 512
    $region37: #{tpu_custom_call.1} parent=1 // pred_fallthru
      _
    %180 = vsyncpa [#allocation3], 1
    %181 = vsyncpa [#allocation5], 1

</llo_original>
